<compile_context>
chip_gen: v6e
topology: v6e:2x2x1
jax: 0.10.0
libtpu: 0.0.40
codegen_flags: <defaults>
</compile_context>

<pallas_src>
import functools

import jax
import jax.numpy as jnp
from jax.experimental import pallas as pl
from jax.experimental.pallas import tpu as pltpu


def _round_up(n, m):
    return ((n + m - 1) // m) * m


def _pick_tile(n, want=1024, min_grid=2):
    """Tile (multiple of 128) for an axis of logical size n.

    Prefers >= min_grid blocks along the axis (megacore), then the largest tile <= `want`
    whose zero-padding waste is <= ~12.5%, then the smallest padded size.
    Returns (tile, padded_size) with padded_size % tile == 0.
    """
    n128 = _round_up(n, 128)
    best = None
    for d in range(1, max(want // 128, 1) + 1):
        t = 128 * d
        if t > n128:
            break
        padded = _round_up(n128, t)
        if padded - n128 > n128 // 8:          # too much zero padding: skip this tile
            continue
        grid_penalty = 0 if padded // t >= min_grid else 1
        key = (grid_penalty, -t, padded)
        if best is None or key < best[0]:
            best = (key, t, padded)
    if best is None:                            # defensive fallback
        return n128, n128
    return best[1], best[2]


def _pad2(x, rows, cols, dtype=None):
    if dtype is not None:
        x = x.astype(dtype)
    return jnp.pad(x, ((0, rows - x.shape[0]), (0, cols - x.shape[1])))


# ----------------------------------------------------------------------------
# Kernel: one bipartite quadrant of one XSimGCL propagation layer.
#   acc   = A_q @ E_src                          (f32 scratch, K-reduction on grid axis 1)
#   r     = acc (+ sign(acc) * noise_eps)        (epilogue; noise pre-normalized * eps)
#   out   = bf16(r)                              (layer output / next layer's E)
#   sumo  = sum_prev + r                         (f32 running layer-sum for the mean)
# ----------------------------------------------------------------------------
def _prop_kernel(*refs, perturbed):
    if perturbed:
        a_ref, e_ref, noise_ref, sum_ref, out_ref, sumo_ref, acc_ref = refs
    else:
        a_ref, e_ref, sum_ref, out_ref, sumo_ref, acc_ref = refs
    k = pl.program_id(1)

    @pl.when(k == 0)
    def _():
        acc_ref[...] = jnp.zeros_like(acc_ref)

    # bf16 x bf16 MXU matmul with f32 accumulation into the resident VMEM scratch.
    acc_ref[...] += jnp.dot(a_ref[...], e_ref[...],
                            preferred_element_type=jnp.float32)

    @pl.when(k == pl.num_programs(1) - 1)
    def _():
        r = acc_ref[...]
        if perturbed:
            # torch: ego += sign(ego) * F.normalize(rand_like(ego), dim=-1) * eps
            # noise_ref already holds F.normalize(noise) * eps (padded lanes are zero).
            r = r + jnp.sign(r) * noise_ref[...].astype(jnp.float32)
        out_ref[...] = r.astype(out_ref.dtype)     # bf16 layer output / handoff
        sumo_ref[...] = sum_ref[...] + r           # f32 running layer sum


def _propagate(a_q, e_src, sum_prev, noise_eps, *, tm, tk, perturbed):
    """(layer_out_bf16, new_running_sum_f32) for one bipartite quadrant."""
    M, K = a_q.shape
    Dp = e_src.shape[1]
    assert M % tm == 0 and K % tk == 0 and Dp % 128 == 0

    in_specs = [
        pl.BlockSpec((tm, tk), lambda i, k: (i, k)),      # adjacency quadrant (bf16)
        pl.BlockSpec((tk, Dp), lambda i, k: (k, 0)),      # source embeddings (bf16)
    ]
    inputs = [a_q, e_src]
    if perturbed:
        in_specs.append(pl.BlockSpec((tm, Dp), lambda i, k: (i, 0)))  # eps * normalized noise
        inputs.append(noise_eps)
    in_specs.append(pl.BlockSpec((tm, Dp), lambda i, k: (i, 0)))      # running sum (read-only)
    inputs.append(sum_prev)

    return pl.pallas_call(
        functools.partial(_prop_kernel, perturbed=perturbed),
        out_shape=(jax.ShapeDtypeStruct((M, Dp), jnp.bfloat16),   # this layer's output
                   jax.ShapeDtypeStruct((M, Dp), jnp.float32)),   # updated running sum
        grid_spec=pltpu.PrefetchScalarGridSpec(
            num_scalar_prefetch=0,
            grid=(M // tm, K // tk),
            in_specs=in_specs,
            out_specs=[pl.BlockSpec((tm, Dp), lambda i, k: (i, 0)),
                       pl.BlockSpec((tm, Dp), lambda i, k: (i, 0))],
            scratch_shapes=[pltpu.VMEM((tm, Dp), jnp.float32)]),
        compiler_params=pltpu.CompilerParams(
            dimension_semantics=("parallel", "arbitrary"),
            vmem_limit_bytes=48 * 1024 * 1024),     # > default scoped limit, < v7x physical
        input_output_aliases={len(inputs) - 1: 1},  # sum_prev buffer reused for new sum
    )(*inputs)


# ----------------------------------------------------------------------------
# XSimGCL_Encoder.forward
# ----------------------------------------------------------------------------
def xsimgcl_forward(norm_adj, user_emb, item_emb, *, eps, n_layers, layer_cl,
                    perturbed=False, key=None, tile=1024):
    U, D = user_emb.shape
    I = item_emb.shape[0]
    t_u, U_pad = _pick_tile(U, tile)
    t_i, I_pad = _pick_tile(I, tile)
    Dp = _round_up(D, 128)          # lane-dense, unmasked output stores

    # Nonzero bipartite quadrants of the normalized adjacency, bf16-cast once.
    a_ui = _pad2(norm_adj[:U, U:U + I], U_pad, I_pad, jnp.bfloat16)   # users <- items
    a_iu = _pad2(norm_adj[U:U + I, :U], I_pad, U_pad, jnp.bfloat16)   # items <- users

    # Source embeddings / layer handoff live in bf16 (MXU input dtype); mean path stays f32.
    e_u = _pad2(user_emb, U_pad, Dp, jnp.bfloat16)
    e_i = _pad2(item_emb, I_pad, Dp, jnp.bfloat16)

    sum_u = jnp.zeros((U_pad, Dp), jnp.float32)
    sum_i = jnp.zeros((I_pad, Dp), jnp.float32)

    if perturbed:
        keys = jax.random.split(key, 2 * n_layers)

    def make_noise(k, n, n_pad):
        # torch.rand_like + F.normalize(dim=-1) * eps, over the true D; padded lanes zero.
        noise = jax.random.uniform(k, (n, D), dtype=jnp.float32)
        inv = 1.0 / jnp.maximum(
            jnp.sqrt(jnp.sum(noise * noise, axis=-1, keepdims=True)), 1e-12)
        return _pad2(noise * inv * eps, n_pad, Dp, jnp.bfloat16)

    cl_u = cl_i = None
    for layer in range(n_layers):
        if perturbed:
            nz_u = make_noise(keys[2 * layer], U, U_pad)
            nz_i = make_noise(keys[2 * layer + 1], I, I_pad)
        else:
            nz_u = nz_i = None
        new_u, sum_u = _propagate(a_ui, e_i, sum_u, nz_u,
                                  tm=t_u, tk=t_i, perturbed=perturbed)
        new_i, sum_i = _propagate(a_iu, e_u, sum_i, nz_i,
                                  tm=t_i, tk=t_u, perturbed=perturbed)
        e_u, e_i = new_u, new_i
        if layer == layer_cl - 1:
            cl_u, cl_i = new_u, new_i

    inv_layers = 1.0 / n_layers
    user_all = sum_u[:U, :D] * inv_layers
    item_all = sum_i[:I, :D] * inv_layers
    if not perturbed:
        return user_all, item_all
    if cl_u is None:      # layer_cl outside [1, n_layers]: CL embeddings = ego embeddings
        cl_user = user_emb.astype(jnp.float32)
        cl_item = item_emb.astype(jnp.float32)
    else:
        cl_user = cl_u[:U, :D].astype(jnp.float32)
        cl_item = cl_i[:I, :D].astype(jnp.float32)
    return user_all, item_all, cl_user, cl_item


# ----------------------------------------------------------------------------
# Deterministic parameter / data construction
# ----------------------------------------------------------------------------
def xavier_uniform(key, shape, dtype=jnp.float32):
    fan_in, fan_out = shape
    bound = (6.0 / (fan_in + fan_out)) ** 0.5
    return jax.random.uniform(key, shape, dtype=dtype, minval=-bound, maxval=bound)


def build_norm_adj(key, user_num, item_num, density=0.1):
    """Symmetric-normalized bipartite adjacency D^-1/2 A D^-1/2, densified."""
    n = user_num + item_num
    r = (jax.random.uniform(key, (user_num, item_num)) < density).astype(jnp.float32)
    adj = jnp.zeros((n, n), jnp.float32)
    adj = adj.at[:user_num, user_num:].set(r)
    adj = adj.at[user_num:, :user_num].set(r.T)
    deg = jnp.sum(adj, axis=1)
    d_inv_sqrt = jnp.where(deg > 0, 1.0 / jnp.sqrt(jnp.maximum(deg, 1e-12)), 0.0)
    return adj * d_inv_sqrt[:, None] * d_inv_sqrt[None, :]


if __name__ == "__main__":
    user_num, item_num, emb_size = 112, 144, 64
    eps, n_layers, layer_cl = 0.2, 2, 1

    root = jax.random.PRNGKey(0)
    k_adj, k_user, k_item, k_noise = jax.random.split(root, 4)

    norm_adj = build_norm_adj(k_adj, user_num, item_num)
    user_emb = xavier_uniform(k_user, (user_num, emb_size))
    item_emb = xavier_uniform(k_item, (item_num, emb_size))

    # perturbed=False path
    u, i = xsimgcl_forward(norm_adj, user_emb, item_emb, eps=eps,
                           n_layers=n_layers, layer_cl=layer_cl, perturbed=False)
    jax.block_until_ready((u, i))
    assert u.shape == (user_num, emb_size) and i.shape == (item_num, emb_size)

    # Pure f32 reference (module semantics). The kernel streams the adjacency and
    # embeddings through the MXU in bf16 (f32 accumulation), so tolerance is loosened.
    ego = jnp.concatenate([user_emb, item_emb], 0)
    layers = []
    for _ in range(n_layers):
        ego = norm_adj @ ego
        layers.append(ego)
    ref = jnp.mean(jnp.stack(layers, 1), 1)
    got = jnp.concatenate([u, i], 0)
    assert jnp.allclose(got, ref, atol=3e-3, rtol=3e-2), \
        float(jnp.max(jnp.abs(got - ref)))

    # perturbed=True path
    u_p, i_p, u_cl, i_cl = xsimgcl_forward(
        norm_adj, user_emb, item_emb, eps=eps, n_layers=n_layers,
        layer_cl=layer_cl, perturbed=True, key=k_noise)
    jax.block_until_ready((u_p, i_p, u_cl, i_cl))
    assert u_p.shape == (user_num, emb_size) and i_p.shape == (item_num, emb_size)
    assert u_cl.shape == (user_num, emb_size) and i_cl.shape == (item_num, emb_size)
    assert bool(jnp.all(jnp.isfinite(u_p))) and bool(jnp.all(jnp.isfinite(i_p)))

    print("KERNEL_OK")
</pallas_src>

<mosaic_0001>
module attributes {stable_mosaic.version = 11 : i64} {
  func.func @_prop_kernel(%arg0: i32, %arg1: i32, %arg2: memref<128x128xbf16, #tpu.memory_space<vmem>>, %arg3: memref<128x128xbf16, #tpu.memory_space<vmem>>, %arg4: memref<128x128xf32, #tpu.memory_space<vmem>>, %arg5: memref<128x128xbf16, #tpu.memory_space<vmem>>, %arg6: memref<128x128xf32, #tpu.memory_space<vmem>>, %arg7: memref<128x128xf32, #tpu.memory_space<vmem>>) attributes {dimension_semantics = [#tpu.dimension_semantics<parallel>, #tpu.dimension_semantics<arbitrary>], iteration_bounds = array<i64: 1, 2>, scalar_prefetch = 0 : i64, scratch_operands = 1 : i64, tpu.core_type = #tpu.core_type<tc>, window_params = [{transform_indices = @transform_0, window_bounds = array<i64: 128, 128>}, {transform_indices = @transform_1, window_bounds = array<i64: 128, 128>}, {transform_indices = @transform_2, window_bounds = array<i64: 128, 128>}, {transform_indices = @transform_3, window_bounds = array<i64: 128, 128>}, {transform_indices = @transform_4, window_bounds = array<i64: 128, 128>}]} {
    %c0_i32 = arith.constant 0 : i32
    %0 = arith.cmpi eq, %arg1, %c0_i32 : i32
    %1 = arith.extui %0 : i1 to i32
    %c0_i32_0 = arith.constant 0 : i32
    %2 = arith.cmpi ne, %1, %c0_i32_0 : i32
    scf.if %2 {
      %cst_9 = arith.constant 0.000000e+00 : f32
      %12 = vector.broadcast %cst_9 : f32 to vector<128x128xf32>
      %c0_10 = arith.constant 0 : index
      %c0_11 = arith.constant 0 : index
      %13 = vector.load %arg7[%c0_10, %c0_11] : memref<128x128xf32, #tpu.memory_space<vmem>>, vector<128x128xf32>
      tpu.vector_store %arg7[%c0_10, %c0_11], %12 {strides = array<i32>} : memref<128x128xf32, #tpu.memory_space<vmem>>, vector<128x128xf32>,
    } else {
    }
    %c0 = arith.constant 0 : index
    %c0_1 = arith.constant 0 : index
    %3 = vector.load %arg7[%c0, %c0_1] : memref<128x128xf32, #tpu.memory_space<vmem>>, vector<128x128xf32>
    %c0_2 = arith.constant 0 : index
    %c0_3 = arith.constant 0 : index
    %4 = vector.load %arg2[%c0_2, %c0_3] : memref<128x128xbf16, #tpu.memory_space<vmem>>, vector<128x128xbf16>
    %c0_4 = arith.constant 0 : index
    %c0_5 = arith.constant 0 : index
    %5 = vector.load %arg3[%c0_4, %c0_5] : memref<128x128xbf16, #tpu.memory_space<vmem>>, vector<128x128xbf16>
    %cst = arith.constant dense<0.000000e+00> : vector<128x128xf32>
    %6 = tpu.matmul %4, %5, %cst {dimension_numbers = #tpu.dot_dimension_numbers<[1], [0], [0], [1], [0, 0, 1, 1], [], []>} : vector<128x128xbf16>, vector<128x128xbf16>, vector<128x128xf32> -> vector<128x128xf32>
    %7 = arith.addf %3, %6 : vector<128x128xf32>
    %c0_6 = arith.constant 0 : index
    %c0_7 = arith.constant 0 : index
    %8 = vector.load %arg7[%c0_6, %c0_7] : memref<128x128xf32, #tpu.memory_space<vmem>>, vector<128x128xf32>
    tpu.vector_store %arg7[%c0_6, %c0_7], %7 {strides = array<i32>} : memref<128x128xf32, #tpu.memory_space<vmem>>, vector<128x128xf32>,
    %c1_i32 = arith.constant 1 : i32
    %9 = arith.cmpi eq, %arg1, %c1_i32 : i32
    %10 = arith.extui %9 : i1 to i32
    %c0_i32_8 = arith.constant 0 : i32
    %11 = arith.cmpi ne, %10, %c0_i32_8 : i32
    scf.if %11 {
      %c0_9 = arith.constant 0 : index
      %c0_10 = arith.constant 0 : index
      %12 = vector.load %arg7[%c0_9, %c0_10] : memref<128x128xf32, #tpu.memory_space<vmem>>, vector<128x128xf32>
      %13 = arith.truncf %12 : vector<128x128xf32> to vector<128x128xbf16>
      %c0_11 = arith.constant 0 : index
      %c0_12 = arith.constant 0 : index
      %14 = vector.load %arg5[%c0_11, %c0_12] : memref<128x128xbf16, #tpu.memory_space<vmem>>, vector<128x128xbf16>
      tpu.vector_store %arg5[%c0_11, %c0_12], %13 {strides = array<i32>} : memref<128x128xbf16, #tpu.memory_space<vmem>>, vector<128x128xbf16>,
      %c0_13 = arith.constant 0 : index
      %c0_14 = arith.constant 0 : index
      %15 = vector.load %arg4[%c0_13, %c0_14] : memref<128x128xf32, #tpu.memory_space<vmem>>, vector<128x128xf32>
      %16 = arith.addf %15, %12 : vector<128x128xf32>
      %c0_15 = arith.constant 0 : index
      %c0_16 = arith.constant 0 : index
      %17 = vector.load %arg6[%c0_15, %c0_16] : memref<128x128xf32, #tpu.memory_space<vmem>>, vector<128x128xf32>
      tpu.vector_store %arg6[%c0_15, %c0_16], %16 {strides = array<i32>} : memref<128x128xf32, #tpu.memory_space<vmem>>, vector<128x128xf32>,
    } else {
    }
    return
  }
  func.func @transform_0(%arg0: i32, %arg1: i32) -> (i32, i32) {
    %c0_i32 = arith.constant 0 : i32
    return %arg0, %arg1 : i32, i32
  }
  func.func @transform_1(%arg0: i32, %arg1: i32) -> (i32, i32) {
    %c0_i32 = arith.constant 0 : i32
    %c0_i32_0 = arith.constant 0 : i32
    return %arg1, %c0_i32 : i32, i32
  }
  func.func @transform_2(%arg0: i32, %arg1: i32) -> (i32, i32) {
    %c0_i32 = arith.constant 0 : i32
    %c0_i32_0 = arith.constant 0 : i32
    return %arg0, %c0_i32 : i32, i32
  }
  func.func @transform_3(%arg0: i32, %arg1: i32) -> (i32, i32) {
    %c0_i32 = arith.constant 0 : i32
    %c0_i32_0 = arith.constant 0 : i32
    return %arg0, %c0_i32 : i32, i32
  }
  func.func @transform_4(%arg0: i32, %arg1: i32) -> (i32, i32) {
    %c0_i32 = arith.constant 0 : i32
    %c0_i32_0 = arith.constant 0 : i32
    return %arg0, %c0_i32 : i32, i32
  }
}

</mosaic_0001>

<llo_original>
// kernel: tpu_custom_call.1
$region0: #{tpu_custom_call.1}
  #allocation0 [shape = 'u32[]', space=smem, size = 0x4, offset = 0x4, fixed_abs, tag = 'smem constant byte address 0x4 - core index']
  #allocation1 [shape = 'u32[144,128]{1,0:T(1,128)}', space=vmem, size = 0x12000, scoped, tag = 'internal scratch']
  #allocation2 [shape = 'f32[128,128]{1,0:T(8,128)}', space=vmem, size = 0x10000, scoped, tag = 'scratch operand']
  %s0 = inlined_call_operand.vmem [shape: bf16[128,256], index: 0, kind: input, shape index: {}]
  %s1 = inlined_call_operand.vmem [shape: bf16[256,128], index: 1, kind: input, shape index: {}]
  %s2 = inlined_call_operand.hbm [shape: f32[128,128], index: 2, kind: input, shape index: {}, may-alias: {2,4}]
  %s3 = inlined_call_operand.hbm [shape: bf16[128,128], index: 3, kind: output, shape index: {0}]
  %s4 = inlined_call_operand.hbm [shape: f32[128,128], index: 4, kind: output, shape index: {1}, may-alias: {2,4}]
  %5 = xla_tuple %s3, %s4
  %s6 = sld [smem:[#allocation0]]
  $region106: #{tpu_custom_call.1} parent=0
    _
  %s8 = ssub.s32 1, %s6
  %s9 = scalar_select 0, %s8, %s6
  $region1: #{tpu_custom_call.1} parent=0
    #allocation3 [shape = 'u8[65536]{0}', space=vmem, size = 0x10000, scoped, tag = 'input window, operand 0']
    #allocation4 [shape = 'u8[65536]{0}', space=vmem, size = 0x10000, scoped, tag = 'input window, operand 2, single buffered']
    #allocation5 [shape = 's32[2]{0}', space=sflag, size = 0x8, scoped, tag = 'scoped memory for tpu_custom_call.1']
    #allocation6 [shape = 's32[2]{0}', space=sflag, size = 0x8, scoped, tag = 'scoped memory for tpu_custom_call.1']
    #allocation7 [shape = 'u8[32768]{0}', space=vmem, size = 0x8000, scoped, tag = 'output window, operand 0, single buffered']
    #allocation8 [shape = 'u8[65536]{0}', space=vmem, size = 0x10000, scoped, tag = 'output window, operand 1, single buffered']
    #allocation9 [shape = 's32[1]{0}', space=sflag, size = 0x4, scoped, tag = 'scoped memory for tpu_custom_call.1']
    %10 = vsyncpa [#allocation5], 0
    %11 = vsyncpa [#allocation6], 0
    %12 = vsyncpa [#allocation9], 0
    loop: start=0, step=1, limit=4
    $region2: #{tpu_custom_call.1} parent=1 // loop_pre_header
      _
    $region3: #{tpu_custom_call.1} parent=1 // loop_header
      %s14 = sphi 0, %s18
      %p15 = scmp.ge.s32.totalorder %s14, 4
      %s21 = sphi 0, %s33
      %s22 = sphi 0, %s29
      %s23 = sphi 0, %s21
      %s24 = sphi 0, %s22
      %s25 = sphi 0, %s23
      %s26 = sphi 0, %s24
      %s38 = sphi 0, %s40
      %s41 = sphi 0, %s38
      %s42 = sphi 0, %s41
      %s58 = sphi 0, %s42
      %s64 = sphi 0, %s66
      %s67 = sphi 0, %s64
      %s68 = sphi 0, %s67
      %s84 = sphi 0, %s68
      %s90 = sphi 0, %s92
      %s93 = sphi 0, %s90
      %s94 = sphi 0, %s93
      %s110 = sphi 0, %s94
      %s116 = sphi 0, %s118
      %s119 = sphi 0, %s116
      %s120 = sphi 0, %s119
      %s136 = sphi 0, %s120
      %s142 = sphi 0, %s144
      %s145 = sphi 0, %s142
      %s146 = sphi 0, %s145
      %s162 = sphi 0, %s146
    $region4: #{tpu_custom_call.1} parent=1 // loop_header_branch
      %17 = sbr.rel (%p15) target = $region8
    $region5: #{tpu_custom_call.1} parent=1 // loop_body
      %s19 = ssub.s32 %s14, 1
      %s20 = ssub.s32 %s14, 2
      %s27 = sadd.s32 1, %s22
      %p28 = scmp.ge.s32.totalorder %s27, 2
      %s29 = scalar_select %p28, 0, %s27
      %s30 = sadd.s32 1, %s21
      %s31 = scalar_select %p28, %s30, %s21
      %p32 = scmp.ge.s32.totalorder %s31, 1
      %s33 = scalar_select %p32, 0, %s31
      %s34 = ssub.s32 %s21, %s33
      %s35 = ssub.s32 %s22, %s29
      %s36 = sor.u32 %s34, %s35
      %p37 = scmp.eq.s32.totalorder %s36, 0
      %s39 = sadd.s32 %s38, 1
      %s40 = scalar_select %p37, %s38, %s39
      %p43 = pneg %p37
      %p44 = scmp.eq.s32.totalorder %s14, 1
      %p45 = por %p43, %p44
      %p46 = scmp.ne.s32.totalorder %s38, %s41
      %p47 = scmp.eq.s32.totalorder %s14, 0
      %p48 = por %p46, %p47
      %p49 = scmp.ne.s32.totalorder %s38, %s41
      %p50 = scmp.eq.s32.totalorder %s19, 1
      %p51 = por %p49, %p50
      %p52 = scmp.ne.s32.totalorder %s41, %s42
      %p53 = scmp.eq.s32.totalorder %s19, 0
      %p54 = por %p52, %p53
      %p55 = scmp.ne.s32.totalorder %s41, %s42
      %p56 = scmp.eq.s32.totalorder %s20, 1
      %p57 = por %p55, %p56
      %p59 = scmp.ne.s32.totalorder %s42, %s58
      %p60 = scmp.eq.s32.totalorder %s20, 0
      %p61 = por %p59, %p60
      %s62 = ssub.s32 %s22, %s29
      %p63 = scmp.eq.s32.totalorder %s62, 0
      %s65 = sadd.s32 %s64, 1
      %s66 = scalar_select %p63, %s64, %s65
      %p69 = pneg %p63
      %p70 = scmp.eq.s32.totalorder %s14, 1
      %p71 = por %p69, %p70
      %p72 = scmp.ne.s32.totalorder %s64, %s67
      %p73 = scmp.eq.s32.totalorder %s14, 0
      %p74 = por %p72, %p73
      %p75 = scmp.ne.s32.totalorder %s64, %s67
      %p76 = scmp.eq.s32.totalorder %s19, 1
      %p77 = por %p75, %p76
      %p78 = scmp.ne.s32.totalorder %s67, %s68
      %p79 = scmp.eq.s32.totalorder %s19, 0
      %p80 = por %p78, %p79
      %p81 = scmp.ne.s32.totalorder %s67, %s68
      %p82 = scmp.eq.s32.totalorder %s20, 1
      %p83 = por %p81, %p82
      %p85 = scmp.ne.s32.totalorder %s68, %s84
      %p86 = scmp.eq.s32.totalorder %s20, 0
      %p87 = por %p85, %p86
      %s88 = ssub.s32 %s21, %s33
      %p89 = scmp.eq.s32.totalorder %s88, 0
      %s91 = sadd.s32 %s90, 1
      %s92 = scalar_select %p89, %s90, %s91
      %p95 = pneg %p89
      %p96 = scmp.eq.s32.totalorder %s14, 1
      %p97 = por %p95, %p96
      %p98 = scmp.ne.s32.totalorder %s90, %s93
      %p99 = scmp.eq.s32.totalorder %s14, 0
      %p100 = por %p98, %p99
      %p101 = scmp.ne.s32.totalorder %s90, %s93
      %p102 = scmp.eq.s32.totalorder %s19, 1
      %p103 = por %p101, %p102
      %p104 = scmp.ne.s32.totalorder %s93, %s94
      %p105 = scmp.eq.s32.totalorder %s19, 0
      %p106 = por %p104, %p105
      %p107 = scmp.ne.s32.totalorder %s93, %s94
      %p108 = scmp.eq.s32.totalorder %s20, 1
      %p109 = por %p107, %p108
      %p111 = scmp.ne.s32.totalorder %s94, %s110
      %p112 = scmp.eq.s32.totalorder %s20, 0
      %p113 = por %p111, %p112
      %s114 = ssub.s32 %s21, %s33
      %p115 = scmp.eq.s32.totalorder %s114, 0
      %s117 = sadd.s32 %s116, 1
      %s118 = scalar_select %p115, %s116, %s117
      %p121 = pneg %p115
      %p122 = scmp.eq.s32.totalorder %s14, 1
      %p123 = por %p121, %p122
      %p124 = scmp.ne.s32.totalorder %s116, %s119
      %p125 = scmp.eq.s32.totalorder %s14, 0
      %p126 = por %p124, %p125
      %p127 = scmp.ne.s32.totalorder %s116, %s119
      %p128 = scmp.eq.s32.totalorder %s19, 1
      %p129 = por %p127, %p128
      %p130 = scmp.ne.s32.totalorder %s119, %s120
      %p131 = scmp.eq.s32.totalorder %s19, 0
      %p132 = por %p130, %p131
      %p133 = scmp.ne.s32.totalorder %s119, %s120
      %p134 = scmp.eq.s32.totalorder %s20, 1
      %p135 = por %p133, %p134
      %p137 = scmp.ne.s32.totalorder %s120, %s136
      %p138 = scmp.eq.s32.totalorder %s20, 0
      %p139 = por %p137, %p138
      %s140 = ssub.s32 %s21, %s33
      %p141 = scmp.eq.s32.totalorder %s140, 0
      %s143 = sadd.s32 %s142, 1
      %s144 = scalar_select %p141, %s142, %s143
      %p147 = pneg %p141
      %p148 = scmp.eq.s32.totalorder %s14, 1
      %p149 = por %p147, %p148
      %p150 = scmp.ne.s32.totalorder %s142, %s145
      %p151 = scmp.eq.s32.totalorder %s14, 0
      %p152 = por %p150, %p151
      %p153 = scmp.ne.s32.totalorder %s142, %s145
      %p154 = scmp.eq.s32.totalorder %s19, 1
      %p155 = por %p153, %p154
      %p156 = scmp.ne.s32.totalorder %s145, %s146
      %p157 = scmp.eq.s32.totalorder %s19, 0
      %p158 = por %p156, %p157
      %p159 = scmp.ne.s32.totalorder %s145, %s146
      %p160 = scmp.eq.s32.totalorder %s20, 1
      %p161 = por %p159, %p160
      %p163 = scmp.ne.s32.totalorder %s146, %s162
      %p164 = scmp.eq.s32.totalorder %s20, 0
      %p165 = por %p163, %p164
      %p166 = scmp.le.s32.totalorder 1, %s14
      %p167 = scmp.lt.s32.totalorder %s14, 3
      %p168 = pnand %p166, %p167
      %p169 = pneg %p168
      // Predicated region
      $region9: #{tpu_custom_call.1} parent=5 // pred_check
        _
      $region10: #{tpu_custom_call.1} parent=5 // pred_check_branch
        %171 = sbr.rel (%p168) target = $region12
      $region11: #{tpu_custom_call.1} parent=5 // pred_region
        %s172 = ssub.s32 %s14, 1
        // Predicated region
        $region13: #{tpu_custom_call.1} parent=11 // pred_check
          %p173 = pneg %p106
        $region14: #{tpu_custom_call.1} parent=11 // pred_check_branch
          %175 = sbr.rel (%p173) target = $region16
        $region15: #{tpu_custom_call.1} parent=11 // pred_region
          %s176 = smul.u32 16, %s23
          %s178 = ssub.s32 2048, 2048
          %179 = vsyncadd [#allocation5], %s178
          %s180 = smul.addr %s176, 128
          %s181 = scalar_lea.hbm %s2, %s180
          %s182 = sshll.u32 [#allocation4], 4
          %s183 = int_to_ptr.vmem [resolvable:$true] %s182
          %188 = dma.hbm_to_vmem [thread:$0]  %s181, 2048, %s183, [#allocation5], 128, 128, 8
        $region16: #{tpu_custom_call.1} parent=11 // pred_fallthru
          _
      $region12: #{tpu_custom_call.1} parent=5 // pred_fallthru
        _
      %p189 = scmp.lt.s32.totalorder %s14, 2
      // Predicated region
      $region17: #{tpu_custom_call.1} parent=5 // pred_check
        %p190 = pneg %p189
      $region18: #{tpu_custom_call.1} parent=5 // pred_check_branch
        %192 = sbr.rel (%p190) target = $region20
      $region19: #{tpu_custom_call.1} parent=5 // pred_region
        // Predicated region
        $region21: #{tpu_custom_call.1} parent=19 // pred_check
          %p193 = pneg %p48
        $region22: #{tpu_custom_call.1} parent=19 // pred_check_branch
          %195 = sbr.rel (%p193) target = $region24
        $region23: #{tpu_custom_call.1} parent=19 // pred_region
          %s196 = sand.u32 %s38, 1
          %s197 = sand.u32 %s38, 1
          %s198 = smul.addr %s197, 64
          %s199 = scalar_lea.vmem [#allocation3], %s198
          %s200 = smul.u32 16, %s21
          %s201 = smul.addr %s200, 2
          %s202 = sadd.s32 %s22, %s201
          %s203 = smul.addr %s202, 4
          %s204 = scalar_lea.vmem %s0, %s203
          // Predicated region
          $region25: #{tpu_custom_call.1} parent=23 // pred_check
            _
          $region26: #{tpu_custom_call.1} parent=23 // pred_check_branch
            %206 = sbr.rel (0) target = $region28
          $region27: #{tpu_custom_call.1} parent=23 // pred_region
            // Predicated region
            $region29: #{tpu_custom_call.1} parent=27 // pred_check
              _
            $region30: #{tpu_custom_call.1} parent=27 // pred_check_branch
              %208 = sbr.rel target = $region32
            $region31: #{tpu_custom_call.1} parent=27 // pred_region
              // Predicated region
              $region44: #{tpu_custom_call.1} parent=31 // pred_check
                _
              $region45: #{tpu_custom_call.1} parent=31 // pred_check_branch
                %254 = sbr.rel (0) target = $region47
              $region46: #{tpu_custom_call.1} parent=31 // pred_region
                loop: start=0, step=1, limit=1
                $region48: #{tpu_custom_call.1} parent=46 // loop_pre_header
                  _
                $region49: #{tpu_custom_call.1} parent=46 // loop_header
                  %s256 = sphi 0, %s260
                  %p257 = scmp.ge.s32.totalorder %s256, 1
                  %s261 = sphi %s204, %s204
                  %s262 = sphi %s199, %s199
                $region50: #{tpu_custom_call.1} parent=46 // loop_header_branch
                  %259 = sbr.rel (%p257) target = $region54
                $region51: #{tpu_custom_call.1} parent=46 // loop_body
                  _
                $region52: #{tpu_custom_call.1} parent=46 // loop_footer
                  %s260 = sadd.s32 1, %s256
                $region53: #{tpu_custom_call.1} parent=46 // loop_footer_branch
                  %255 = sbr.rel target = $region49
                $region54: #{tpu_custom_call.1} parent=46 // loop_exit
                  _
                %s264 = ssub.s32 16, 1
                loop: start=0, step=1, limit=1
                $region55: #{tpu_custom_call.1} parent=46 // loop_pre_header
                  _
                $region56: #{tpu_custom_call.1} parent=46 // loop_header
                  %s266 = sphi 0, %s270
                  %p267 = scmp.ge.s32.totalorder %s266, 1
                  %s271 = sphi %s204, %s204
                  %s272 = sphi %s199, %s199
                $region57: #{tpu_custom_call.1} parent=46 // loop_header_branch
                  %269 = sbr.rel (%p267) target = $region61
                $region58: #{tpu_custom_call.1} parent=46 // loop_body
                  %v273 = vld [vmem:[%s271] sm:%s264]
                  %274 = vst [vmem:[%s272] sm:%s264] %v273
                  %v275 = vld [vmem:[%s271 + $0x8] sm:%s264]
                  %276 = vst [vmem:[%s272 + $0x4] sm:%s264] %v275
                  %v277 = vld [vmem:[%s271 + $0x10] sm:%s264]
                  %278 = vst [vmem:[%s272 + $0x8] sm:%s264] %v277
                  %v279 = vld [vmem:[%s271 + $0x18] sm:%s264]
                  %280 = vst [vmem:[%s272 + $0xc] sm:%s264] %v279
                  %v281 = vld [vmem:[%s271 + $0x20] sm:%s264]
                  %282 = vst [vmem:[%s272 + $0x10] sm:%s264] %v281
                  %v283 = vld [vmem:[%s271 + $0x28] sm:%s264]
                  %284 = vst [vmem:[%s272 + $0x14] sm:%s264] %v283
                  %v285 = vld [vmem:[%s271 + $0x30] sm:%s264]
                  %286 = vst [vmem:[%s272 + $0x18] sm:%s264] %v285
                  %v287 = vld [vmem:[%s271 + $0x38] sm:%s264]
                  %288 = vst [vmem:[%s272 + $0x1c] sm:%s264] %v287
                  %v289 = vld [vmem:[%s271 + $0x40] sm:%s264]
                  %290 = vst [vmem:[%s272 + $0x20] sm:%s264] %v289
                  %v291 = vld [vmem:[%s271 + $0x48] sm:%s264]
                  %292 = vst [vmem:[%s272 + $0x24] sm:%s264] %v291
                  %v293 = vld [vmem:[%s271 + $0x50] sm:%s264]
                  %294 = vst [vmem:[%s272 + $0x28] sm:%s264] %v293
                  %v295 = vld [vmem:[%s271 + $0x58] sm:%s264]
                  %296 = vst [vmem:[%s272 + $0x2c] sm:%s264] %v295
                  %v297 = vld [vmem:[%s271 + $0x60] sm:%s264]
                  %298 = vst [vmem:[%s272 + $0x30] sm:%s264] %v297
                  %v299 = vld [vmem:[%s271 + $0x68] sm:%s264]
                  %300 = vst [vmem:[%s272 + $0x34] sm:%s264] %v299
                  %v301 = vld [vmem:[%s271 + $0x70] sm:%s264]
                  %302 = vst [vmem:[%s272 + $0x38] sm:%s264] %v301
                  %v303 = vld [vmem:[%s271 + $0x78] sm:%s264]
                  %304 = vst [vmem:[%s272 + $0x3c] sm:%s264] %v303
                $region59: #{tpu_custom_call.1} parent=46 // loop_footer
                  %s270 = sadd.s32 1, %s266
                $region60: #{tpu_custom_call.1} parent=46 // loop_footer_branch
                  %265 = sbr.rel target = $region56
                $region61: #{tpu_custom_call.1} parent=46 // loop_exit
                  _
              $region47: #{tpu_custom_call.1} parent=31 // pred_fallthru
                _
            $region32: #{tpu_custom_call.1} parent=27 // pred_fallthru
              _
            // Predicated region
            $region33: #{tpu_custom_call.1} parent=27 // pred_check
              _
            $region34: #{tpu_custom_call.1} parent=27 // pred_check_branch
              %210 = sbr.rel (0) target = $region36
            $region35: #{tpu_custom_call.1} parent=27 // pred_region
              %s212 = ssub.s32 16, 1
              loop: start=0, step=1, limit=1
              $region37: #{tpu_custom_call.1} parent=35 // loop_pre_header
                _
              $region38: #{tpu_custom_call.1} parent=35 // loop_header
                %s214 = sphi 0, %s218
                %p215 = scmp.ge.s32.totalorder %s214, 1
                %s219 = sphi %s204, %s204
                %s220 = sphi %s199, %s199
              $region39: #{tpu_custom_call.1} parent=35 // loop_header_branch
                %217 = sbr.rel (%p215) target = $region43
              $region40: #{tpu_custom_call.1} parent=35 // loop_body
                %v221 = vld [vmem:[%s219] sm:%s212]
                %222 = vst [vmem:[%s220] sm:%s212] %v221
                %v223 = vld [vmem:[%s219 + $0x8] sm:%s212]
                %224 = vst [vmem:[%s220 + $0x4] sm:%s212] %v223
                %v225 = vld [vmem:[%s219 + $0x10] sm:%s212]
                %226 = vst [vmem:[%s220 + $0x8] sm:%s212] %v225
                %v227 = vld [vmem:[%s219 + $0x18] sm:%s212]
                %228 = vst [vmem:[%s220 + $0xc] sm:%s212] %v227
                %v229 = vld [vmem:[%s219 + $0x20] sm:%s212]
                %230 = vst [vmem:[%s220 + $0x10] sm:%s212] %v229
                %v231 = vld [vmem:[%s219 + $0x28] sm:%s212]
                %232 = vst [vmem:[%s220 + $0x14] sm:%s212] %v231
                %v233 = vld [vmem:[%s219 + $0x30] sm:%s212]
                %234 = vst [vmem:[%s220 + $0x18] sm:%s212] %v233
                %v235 = vld [vmem:[%s219 + $0x38] sm:%s212]
                %236 = vst [vmem:[%s220 + $0x1c] sm:%s212] %v235
                %v237 = vld [vmem:[%s219 + $0x40] sm:%s212]
                %238 = vst [vmem:[%s220 + $0x20] sm:%s212] %v237
                %v239 = vld [vmem:[%s219 + $0x48] sm:%s212]
                %240 = vst [vmem:[%s220 + $0x24] sm:%s212] %v239
                %v241 = vld [vmem:[%s219 + $0x50] sm:%s212]
                %242 = vst [vmem:[%s220 + $0x28] sm:%s212] %v241
                %v243 = vld [vmem:[%s219 + $0x58] sm:%s212]
                %244 = vst [vmem:[%s220 + $0x2c] sm:%s212] %v243
                %v245 = vld [vmem:[%s219 + $0x60] sm:%s212]
                %246 = vst [vmem:[%s220 + $0x30] sm:%s212] %v245
                %v247 = vld [vmem:[%s219 + $0x68] sm:%s212]
                %248 = vst [vmem:[%s220 + $0x34] sm:%s212] %v247
                %v249 = vld [vmem:[%s219 + $0x70] sm:%s212]
                %250 = vst [vmem:[%s220 + $0x38] sm:%s212] %v249
                %v251 = vld [vmem:[%s219 + $0x78] sm:%s212]
                %252 = vst [vmem:[%s220 + $0x3c] sm:%s212] %v251
              $region41: #{tpu_custom_call.1} parent=35 // loop_footer
                %s218 = sadd.s32 1, %s214
              $region42: #{tpu_custom_call.1} parent=35 // loop_footer_branch
                %213 = sbr.rel target = $region38
              $region43: #{tpu_custom_call.1} parent=35 // loop_exit
                _
            $region36: #{tpu_custom_call.1} parent=27 // pred_fallthru
              _
          $region28: #{tpu_custom_call.1} parent=23 // pred_fallthru
            _
          %305 = vnop
        $region24: #{tpu_custom_call.1} parent=19 // pred_fallthru
          _
        // Predicated region
        $region62: #{tpu_custom_call.1} parent=19 // pred_check
          %p306 = pneg %p74
        $region63: #{tpu_custom_call.1} parent=19 // pred_check_branch
          %308 = sbr.rel (%p306) target = $region65
        $region64: #{tpu_custom_call.1} parent=19 // pred_region
          %s309 = smul.u32 16, %s22
          %p310 = scmp.lt.s32.totalorder %s309, 31
          %s311 = scalar_select %p310, %s309, 31
          %s312 = smul.addr %s311, 4
          %s313 = scalar_lea.vmem %s1, %s312
          %s314 = smul.u32 16, %s22
        $region65: #{tpu_custom_call.1} parent=19 // pred_fallthru
          _
      $region20: #{tpu_custom_call.1} parent=5 // pred_fallthru
        _
      %p315 = scmp.le.s32.totalorder 1, %s14
      %p316 = scmp.lt.s32.totalorder %s14, 3
      %p317 = pnand %p315, %p316
      %p318 = pneg %p317
      // Predicated region
      $region66: #{tpu_custom_call.1} parent=5 // pred_check
        _
      $region67: #{tpu_custom_call.1} parent=5 // pred_check_branch
        %320 = sbr.rel (%p317) target = $region69
      $region68: #{tpu_custom_call.1} parent=5 // pred_region
        %s321 = ssub.s32 %s14, 1
        %s322 = sand.u32 %s41, 1
        %s323 = sand.u32 %s41, 1
        %s324 = smul.addr %s323, 64
        %s325 = scalar_lea.vmem [#allocation3], %s324
        // Predicated region
        $region70: #{tpu_custom_call.1} parent=68 // pred_check
          %p326 = pneg %p54
        $region71: #{tpu_custom_call.1} parent=68 // pred_check_branch
          %328 = sbr.rel (%p326) target = $region73
        $region72: #{tpu_custom_call.1} parent=68 // pred_region
          _
        $region73: #{tpu_custom_call.1} parent=68 // pred_fallthru
          _
        // Predicated region
        $region74: #{tpu_custom_call.1} parent=68 // pred_check
          %p329 = pneg %p106
        $region75: #{tpu_custom_call.1} parent=68 // pred_check_branch
          %331 = sbr.rel (%p329) target = $region77
        $region76: #{tpu_custom_call.1} parent=68 // pred_region
          %332 = dma.done [#allocation5], 2048
        $region77: #{tpu_custom_call.1} parent=68 // pred_fallthru
          _
        %s333 = sand.u32 %s41, 1
        %s334 = sand.u32 %s41, 1
        %s335 = smul.addr %s334, 64
        %s336 = scalar_lea.vmem [#allocation3], %s335
        %p337 = pneg %p54
        %p338 = pneg %p51
        %s339 = smul.u32 16, %s24
        %p340 = scmp.lt.s32.totalorder %s339, 31
        %s341 = scalar_select %p340, %s339, 31
        %s342 = smul.addr %s341, 4
        %s343 = scalar_lea.vmem %s1, %s342
        %p344 = pneg %p80
        %p345 = pneg %p77
        %p346 = pneg %p106
        %p347 = pneg %p103
        %p348 = pneg %p132
        %p349 = pneg %p129
        %p350 = pneg %p158
        %p351 = pneg %p155
        %s352 = smul.u32 16, %s23
        %s353 = smul.u32 16, %s24
        %p354 = scmp.lt.s32.totalorder %s353, 31
        %s355 = scalar_select %p354, %s353, 31
        %s356 = smul.addr %s355, 4
        %s357 = scalar_lea.vmem %s1, %s356
        %s358 = smul.u32 16, %s24
        %s359 = smul.u32 16, %s23
        %s360 = smul.u32 16, %s23
        %s361 = smul.u32 16, %s23
        %p363 = scmp.eq.s32.totalorder %s24, 0
        // Predicated region
        $region78: #{tpu_custom_call.1} parent=68 // pred_check
          %p364 = pneg %p363
        $region79: #{tpu_custom_call.1} parent=68 // pred_check_branch
          %366 = sbr.rel (%p364) target = $region81
        $region80: #{tpu_custom_call.1} parent=68 // pred_region
          %367 = vst [vmem:[#allocation2] sm:$0xff] 0.0
          %368 = vst [vmem:[#allocation2 + $0x8] sm:$0xff] 0.0
          %369 = vst [vmem:[#allocation2 + $0x10] sm:$0xff] 0.0
          %370 = vst [vmem:[#allocation2 + $0x18] sm:$0xff] 0.0
          %371 = vst [vmem:[#allocation2 + $0x20] sm:$0xff] 0.0
          %372 = vst [vmem:[#allocation2 + $0x28] sm:$0xff] 0.0
          %373 = vst [vmem:[#allocation2 + $0x30] sm:$0xff] 0.0
          %374 = vst [vmem:[#allocation2 + $0x38] sm:$0xff] 0.0
          %375 = vst [vmem:[#allocation2 + $0x40] sm:$0xff] 0.0
          %376 = vst [vmem:[#allocation2 + $0x48] sm:$0xff] 0.0
          %377 = vst [vmem:[#allocation2 + $0x50] sm:$0xff] 0.0
          %378 = vst [vmem:[#allocation2 + $0x58] sm:$0xff] 0.0
          %379 = vst [vmem:[#allocation2 + $0x60] sm:$0xff] 0.0
          %380 = vst [vmem:[#allocation2 + $0x68] sm:$0xff] 0.0
          %381 = vst [vmem:[#allocation2 + $0x70] sm:$0xff] 0.0
          %382 = vst [vmem:[#allocation2 + $0x78] sm:$0xff] 0.0
        $region81: #{tpu_custom_call.1} parent=68 // pred_fallthru
          _
        %v383 = vld [vmem:[#allocation2] sm:$0xff]
        %v384 = vld [vmem:[#allocation2 + $0x8] sm:$0xff]
        %v385 = vld [vmem:[#allocation2 + $0x10] sm:$0xff]
        %v386 = vld [vmem:[#allocation2 + $0x18] sm:$0xff]
        %v387 = vld [vmem:[#allocation2 + $0x20] sm:$0xff]
        %v388 = vld [vmem:[#allocation2 + $0x28] sm:$0xff]
        %v389 = vld [vmem:[#allocation2 + $0x30] sm:$0xff]
        %v390 = vld [vmem:[#allocation2 + $0x38] sm:$0xff]
        %v391 = vld [vmem:[#allocation2 + $0x40] sm:$0xff]
        %v392 = vld [vmem:[#allocation2 + $0x48] sm:$0xff]
        %v393 = vld [vmem:[#allocation2 + $0x50] sm:$0xff]
        %v394 = vld [vmem:[#allocation2 + $0x58] sm:$0xff]
        %v395 = vld [vmem:[#allocation2 + $0x60] sm:$0xff]
        %v396 = vld [vmem:[#allocation2 + $0x68] sm:$0xff]
        %v397 = vld [vmem:[#allocation2 + $0x70] sm:$0xff]
        %v398 = vld [vmem:[#allocation2 + $0x78] sm:$0xff]
        %v399 = vld [vmem:[%s325] sm:$0xf]
        %v400 = vld [vmem:[%s325 + $0x4] sm:$0xf]
        %v401 = vld [vmem:[%s325 + $0x8] sm:$0xf]
        %v402 = vld [vmem:[%s325 + $0xc] sm:$0xf]
        %v403 = vld [vmem:[%s325 + $0x10] sm:$0xf]
        %v404 = vld [vmem:[%s325 + $0x14] sm:$0xf]
        %v405 = vld [vmem:[%s325 + $0x18] sm:$0xf]
        %v406 = vld [vmem:[%s325 + $0x1c] sm:$0xf]
        %v407 = vld [vmem:[%s325 + $0x20] sm:$0xf]
        %v408 = vld [vmem:[%s325 + $0x24] sm:$0xf]
        %v409 = vld [vmem:[%s325 + $0x28] sm:$0xf]
        %v410 = vld [vmem:[%s325 + $0x2c] sm:$0xf]
        %v411 = vld [vmem:[%s325 + $0x30] sm:$0xf]
        %v412 = vld [vmem:[%s325 + $0x34] sm:$0xf]
        %v413 = vld [vmem:[%s325 + $0x38] sm:$0xf]
        %v414 = vld [vmem:[%s325 + $0x3c] sm:$0xf]
        %v415 = vld [vmem:[%s357] sm:$0xf]
        %v416 = vld [vmem:[%s357 + $0x4] sm:$0xf]
        %v417 = vld [vmem:[%s357 + $0x8] sm:$0xf]
        %v418 = vld [vmem:[%s357 + $0xc] sm:$0xf]
        %v419 = vld [vmem:[%s357 + $0x10] sm:$0xf]
        %v420 = vld [vmem:[%s357 + $0x14] sm:$0xf]
        %v421 = vld [vmem:[%s357 + $0x18] sm:$0xf]
        %v422 = vld [vmem:[%s357 + $0x1c] sm:$0xf]
        %v423 = vld [vmem:[%s357 + $0x20] sm:$0xf]
        %v424 = vld [vmem:[%s357 + $0x24] sm:$0xf]
        %v425 = vld [vmem:[%s357 + $0x28] sm:$0xf]
        %v426 = vld [vmem:[%s357 + $0x2c] sm:$0xf]
        %v427 = vld [vmem:[%s357 + $0x30] sm:$0xf]
        %v428 = vld [vmem:[%s357 + $0x34] sm:$0xf]
        %v429 = vld [vmem:[%s357 + $0x38] sm:$0xf]
        %v430 = vld [vmem:[%s357 + $0x3c] sm:$0xf]
        %v447 = vunpack.c.l.b16 %v399
        %v448 = vunpack.c.l.b16 %v400
        %v449 = vunpack.c.l.b16 %v401
        %v450 = vunpack.c.l.b16 %v402
        %v451 = vunpack.c.l.b16 %v403
        %v452 = vunpack.c.l.b16 %v404
        %v453 = vunpack.c.l.b16 %v405
        %v454 = vunpack.c.l.b16 %v406
        %v455 = vunpack.c.l.b16 %v407
        %v456 = vunpack.c.l.b16 %v408
        %v457 = vunpack.c.l.b16 %v409
        %v458 = vunpack.c.l.b16 %v410
        %v459 = vunpack.c.l.b16 %v411
        %v460 = vunpack.c.l.b16 %v412
        %v461 = vunpack.c.l.b16 %v413
        %v462 = vunpack.c.l.b16 %v414
        %v463 = vpack.c.b16 %v448, %v447
        %v464 = vpack.c.b16 %v450, %v449
        %v465 = vpack.c.b16 %v452, %v451
        %v466 = vpack.c.b16 %v454, %v453
        %v467 = vpack.c.b16 %v456, %v455
        %v468 = vpack.c.b16 %v458, %v457
        %v469 = vpack.c.b16 %v460, %v459
        %v470 = vpack.c.b16 %v462, %v461
        %v495 = vunpack.c.l.b16 %v415
        %v496 = vunpack.c.l.b16 %v416
        %v497 = vunpack.c.l.b16 %v417
        %v498 = vunpack.c.l.b16 %v418
        %v499 = vunpack.c.l.b16 %v419
        %v500 = vunpack.c.l.b16 %v420
        %v501 = vunpack.c.l.b16 %v421
        %v502 = vunpack.c.l.b16 %v422
        %v503 = vunpack.c.l.b16 %v423
        %v504 = vunpack.c.l.b16 %v424
        %v505 = vunpack.c.l.b16 %v425
        %v506 = vunpack.c.l.b16 %v426
        %v507 = vunpack.c.l.b16 %v427
        %v508 = vunpack.c.l.b16 %v428
        %v509 = vunpack.c.l.b16 %v429
        %v510 = vunpack.c.l.b16 %v430
        %v511 = vpack.c.b16 %v496, %v495
        %v512 = vpack.c.b16 %v498, %v497
        %v513 = vpack.c.b16 %v500, %v499
        %v514 = vpack.c.b16 %v502, %v501
        %v515 = vpack.c.b16 %v504, %v503
        %v516 = vpack.c.b16 %v506, %v505
        %v517 = vpack.c.b16 %v508, %v507
        %v518 = vpack.c.b16 %v510, %v509
        %527 = vmatprep.subr.bf16.mxu0 0
        %528 = vmatpush1.bf16.msra.mxu0 %v518
        %529 = vmatprep.subr.bf16.mxu0 0
        %530 = vmatpush1.bf16.msra.mxu0 %v517
        %531 = vmatprep.subr.bf16.mxu0 0
        %532 = vmatpush1.bf16.msra.mxu0 %v516
        %533 = vmatprep.subr.bf16.mxu0 0
        %534 = vmatpush1.bf16.msra.mxu0 %v515
        %535 = vmatprep.subr.bf16.mxu0 0
        %536 = vmatpush1.bf16.msra.mxu0 %v514
        %537 = vmatprep.subr.bf16.mxu0 0
        %538 = vmatpush1.bf16.msra.mxu0 %v513
        %539 = vmatprep.subr.bf16.mxu0 0
        %540 = vmatpush1.bf16.msra.mxu0 %v512
        %541 = vmatprep.subr.bf16.mxu0 0
        %542 = vmatpush1.bf16.msra.mxu0 %v511
        %543 = vmatprep.subr.bf16.mxu0 0
        %544 = vmatpush2.bf16.msra.mxu0 0
        %545 = vmatprep.subr.bf16.mxu0 0
        %546 = vmatpush2.bf16.msra.mxu0 0
        %547 = vmatprep.subr.bf16.mxu0 0
        %548 = vmatpush2.bf16.msra.mxu0 0
        %549 = vmatprep.subr.bf16.mxu0 0
        %550 = vmatpush2.bf16.msra.mxu0 0
        %551 = vmatprep.subr.bf16.mxu0 0
        %552 = vmatpush2.bf16.msra.mxu0 0
        %553 = vmatprep.subr.bf16.mxu0 0
        %554 = vmatpush2.bf16.msra.mxu0 0
        %555 = vmatprep.subr.bf16.mxu0 0
        %556 = vmatpush2.bf16.msra.mxu0 0
        %557 = vmatprep.subr.bf16.mxu0 0
        %558 = vmatpush2.bf16.msra.mxu0 0
        %559 = vmatprep.mubr.bf16.mxu0 0
        %560 = vmatmul.mubr.bf16.gmra.mxu0 %v463
        %v561 = vpop.f32.mrf.mxu0
        %v562 = vadd.f32 0.0, %v561
        %v563 = vpop.f32.mrf.mxu0
        %v564 = vpop.f32.mrf.mxu0
        %v565 = vadd.f32 0.0, %v564
        %v566 = vpop.f32.mrf.mxu0
        %567 = vmatprep.mubr.bf16.mxu0 0
        %568 = vmatmul.mubr.bf16.gmra.mxu0 %v464
        %v569 = vpop.f32.mrf.mxu0
        %v570 = vadd.f32 0.0, %v569
        %v571 = vpop.f32.mrf.mxu0
        %v572 = vpop.f32.mrf.mxu0
        %v573 = vadd.f32 0.0, %v572
        %v574 = vpop.f32.mrf.mxu0
        %575 = vmatprep.mubr.bf16.mxu0 0
        %576 = vmatmul.mubr.bf16.gmra.mxu0 %v465
        %v577 = vpop.f32.mrf.mxu0
        %v578 = vadd.f32 0.0, %v577
        %v579 = vpop.f32.mrf.mxu0
        %v580 = vpop.f32.mrf.mxu0
        %v581 = vadd.f32 0.0, %v580
        %v582 = vpop.f32.mrf.mxu0
        %583 = vmatprep.mubr.bf16.mxu0 0
        %584 = vmatmul.mubr.bf16.gmra.mxu0 %v466
        %v585 = vpop.f32.mrf.mxu0
        %v586 = vadd.f32 0.0, %v585
        %v587 = vpop.f32.mrf.mxu0
        %v588 = vpop.f32.mrf.mxu0
        %v589 = vadd.f32 0.0, %v588
        %v590 = vpop.f32.mrf.mxu0
        %591 = vmatprep.mubr.bf16.mxu0 0
        %592 = vmatmul.mubr.bf16.gmra.mxu0 %v467
        %v593 = vpop.f32.mrf.mxu0
        %v594 = vadd.f32 0.0, %v593
        %v595 = vpop.f32.mrf.mxu0
        %v596 = vpop.f32.mrf.mxu0
        %v597 = vadd.f32 0.0, %v596
        %v598 = vpop.f32.mrf.mxu0
        %599 = vmatprep.mubr.bf16.mxu0 0
        %600 = vmatmul.mubr.bf16.gmra.mxu0 %v468
        %v601 = vpop.f32.mrf.mxu0
        %v602 = vadd.f32 0.0, %v601
        %v603 = vpop.f32.mrf.mxu0
        %v604 = vpop.f32.mrf.mxu0
        %v605 = vadd.f32 0.0, %v604
        %v606 = vpop.f32.mrf.mxu0
        %607 = vmatprep.mubr.bf16.mxu0 0
        %608 = vmatmul.mubr.bf16.gmra.mxu0 %v469
        %v609 = vpop.f32.mrf.mxu0
        %v610 = vadd.f32 0.0, %v609
        %v611 = vpop.f32.mrf.mxu0
        %v612 = vpop.f32.mrf.mxu0
        %v613 = vadd.f32 0.0, %v612
        %v614 = vpop.f32.mrf.mxu0
        %615 = vmatprep.mubr.bf16.mxu0 0
        %616 = vmatmul.mubr.bf16.gmra.mxu0 %v470
        %v617 = vpop.f32.mrf.mxu0
        %v618 = vadd.f32 0.0, %v617
        %v619 = vpop.f32.mrf.mxu0
        %v620 = vpop.f32.mrf.mxu0
        %v621 = vadd.f32 0.0, %v620
        %v622 = vpop.f32.mrf.mxu0
        %623 = vdwg.mxu0
        %v624 = vadd.f32 %v383, %v562
        %v625 = vadd.f32 %v384, %v565
        %v626 = vadd.f32 %v385, %v570
        %v627 = vadd.f32 %v386, %v573
        %v628 = vadd.f32 %v387, %v578
        %v629 = vadd.f32 %v388, %v581
        %v630 = vadd.f32 %v389, %v586
        %v631 = vadd.f32 %v390, %v589
        %v632 = vadd.f32 %v391, %v594
        %v633 = vadd.f32 %v392, %v597
        %v634 = vadd.f32 %v393, %v602
        %v635 = vadd.f32 %v394, %v605
        %v636 = vadd.f32 %v395, %v610
        %v637 = vadd.f32 %v396, %v613
        %v638 = vadd.f32 %v397, %v618
        %v639 = vadd.f32 %v398, %v621
        %640 = vst [vmem:[#allocation2] sm:$0xff] %v624
        %641 = vst [vmem:[#allocation2 + $0x8] sm:$0xff] %v625
        %642 = vst [vmem:[#allocation2 + $0x10] sm:$0xff] %v626
        %643 = vst [vmem:[#allocation2 + $0x18] sm:$0xff] %v627
        %644 = vst [vmem:[#allocation2 + $0x20] sm:$0xff] %v628
        %645 = vst [vmem:[#allocation2 + $0x28] sm:$0xff] %v629
        %646 = vst [vmem:[#allocation2 + $0x30] sm:$0xff] %v630
        %647 = vst [vmem:[#allocation2 + $0x38] sm:$0xff] %v631
        %648 = vst [vmem:[#allocation2 + $0x40] sm:$0xff] %v632
        %649 = vst [vmem:[#allocation2 + $0x48] sm:$0xff] %v633
        %650 = vst [vmem:[#allocation2 + $0x50] sm:$0xff] %v634
        %651 = vst [vmem:[#allocation2 + $0x58] sm:$0xff] %v635
        %652 = vst [vmem:[#allocation2 + $0x60] sm:$0xff] %v636
        %653 = vst [vmem:[#allocation2 + $0x68] sm:$0xff] %v637
        %654 = vst [vmem:[#allocation2 + $0x70] sm:$0xff] %v638
        %655 = vst [vmem:[#allocation2 + $0x78] sm:$0xff] %v639
        %p656 = scmp.eq.s32.totalorder %s24, 1
        // Predicated region
        $region82: #{tpu_custom_call.1} parent=68 // pred_check
          %p657 = pneg %p656
        $region83: #{tpu_custom_call.1} parent=68 // pred_check_branch
          %659 = sbr.rel (%p657) target = $region85
        $region84: #{tpu_custom_call.1} parent=68 // pred_region
          %v660 = vld [vmem:[#allocation2] sm:$0xff]
          %v661 = vld [vmem:[#allocation2 + $0x8] sm:$0xff]
          %v662 = vld [vmem:[#allocation2 + $0x10] sm:$0xff]
          %v663 = vld [vmem:[#allocation2 + $0x18] sm:$0xff]
          %v664 = vld [vmem:[#allocation2 + $0x20] sm:$0xff]
          %v665 = vld [vmem:[#allocation2 + $0x28] sm:$0xff]
          %v666 = vld [vmem:[#allocation2 + $0x30] sm:$0xff]
          %v667 = vld [vmem:[#allocation2 + $0x38] sm:$0xff]
          %v668 = vld [vmem:[#allocation2 + $0x40] sm:$0xff]
          %v669 = vld [vmem:[#allocation2 + $0x48] sm:$0xff]
          %v670 = vld [vmem:[#allocation2 + $0x50] sm:$0xff]
          %v671 = vld [vmem:[#allocation2 + $0x58] sm:$0xff]
          %v672 = vld [vmem:[#allocation2 + $0x60] sm:$0xff]
          %v673 = vld [vmem:[#allocation2 + $0x68] sm:$0xff]
          %v674 = vld [vmem:[#allocation2 + $0x70] sm:$0xff]
          %v675 = vld [vmem:[#allocation2 + $0x78] sm:$0xff]
          %v676 = vpack.c.bf16 %v661, %v660
          %v677 = vpack.c.bf16 %v663, %v662
          %v678 = vpack.c.bf16 %v665, %v664
          %v679 = vpack.c.bf16 %v667, %v666
          %v680 = vpack.c.bf16 %v669, %v668
          %v681 = vpack.c.bf16 %v671, %v670
          %v682 = vpack.c.bf16 %v673, %v672
          %v683 = vpack.c.bf16 %v675, %v674
          %v692 = vunpack.c.l.b16 %v676
          %v693 = vunpack.c.h.b16 %v676
          %v694 = vunpack.c.l.b16 %v677
          %v695 = vunpack.c.h.b16 %v677
          %v696 = vunpack.c.l.b16 %v678
          %v697 = vunpack.c.h.b16 %v678
          %v698 = vunpack.c.l.b16 %v679
          %v699 = vunpack.c.h.b16 %v679
          %v700 = vunpack.c.l.b16 %v680
          %v701 = vunpack.c.h.b16 %v680
          %v702 = vunpack.c.l.b16 %v681
          %v703 = vunpack.c.h.b16 %v681
          %v704 = vunpack.c.l.b16 %v682
          %v705 = vunpack.c.h.b16 %v682
          %v706 = vunpack.c.l.b16 %v683
          %v707 = vunpack.c.h.b16 %v683
          %v708 = vpack.c.b16 %v692, %v692
          %v709 = vpack.c.b16 %v693, %v693
          %v710 = vpack.c.b16 %v694, %v694
          %v711 = vpack.c.b16 %v695, %v695
          %v712 = vpack.c.b16 %v696, %v696
          %v713 = vpack.c.b16 %v697, %v697
          %v714 = vpack.c.b16 %v698, %v698
          %v715 = vpack.c.b16 %v699, %v699
          %v716 = vpack.c.b16 %v700, %v700
          %v717 = vpack.c.b16 %v701, %v701
          %v718 = vpack.c.b16 %v702, %v702
          %v719 = vpack.c.b16 %v703, %v703
          %v720 = vpack.c.b16 %v704, %v704
          %v721 = vpack.c.b16 %v705, %v705
          %v722 = vpack.c.b16 %v706, %v706
          %v723 = vpack.c.b16 %v707, %v707
          %740 = vst [vmem:[#allocation7] sm:$0xf] %v708
          %741 = vst [vmem:[#allocation7 + $0x4] sm:$0xf] %v709
          %742 = vst [vmem:[#allocation7 + $0x8] sm:$0xf] %v710
          %743 = vst [vmem:[#allocation7 + $0xc] sm:$0xf] %v711
          %744 = vst [vmem:[#allocation7 + $0x10] sm:$0xf] %v712
          %745 = vst [vmem:[#allocation7 + $0x14] sm:$0xf] %v713
          %746 = vst [vmem:[#allocation7 + $0x18] sm:$0xf] %v714
          %747 = vst [vmem:[#allocation7 + $0x1c] sm:$0xf] %v715
          %748 = vst [vmem:[#allocation7 + $0x20] sm:$0xf] %v716
          %749 = vst [vmem:[#allocation7 + $0x24] sm:$0xf] %v717
          %750 = vst [vmem:[#allocation7 + $0x28] sm:$0xf] %v718
          %751 = vst [vmem:[#allocation7 + $0x2c] sm:$0xf] %v719
          %752 = vst [vmem:[#allocation7 + $0x30] sm:$0xf] %v720
          %753 = vst [vmem:[#allocation7 + $0x34] sm:$0xf] %v721
          %754 = vst [vmem:[#allocation7 + $0x38] sm:$0xf] %v722
          %755 = vst [vmem:[#allocation7 + $0x3c] sm:$0xf] %v723
          %v756 = vld [vmem:[#allocation4] sm:$0xff]
          %v757 = vld [vmem:[#allocation4 + $0x8] sm:$0xff]
          %v758 = vld [vmem:[#allocation4 + $0x10] sm:$0xff]
          %v759 = vld [vmem:[#allocation4 + $0x18] sm:$0xff]
          %v760 = vld [vmem:[#allocation4 + $0x20] sm:$0xff]
          %v761 = vld [vmem:[#allocation4 + $0x28] sm:$0xff]
          %v762 = vld [vmem:[#allocation4 + $0x30] sm:$0xff]
          %v763 = vld [vmem:[#allocation4 + $0x38] sm:$0xff]
          %v764 = vld [vmem:[#allocation4 + $0x40] sm:$0xff]
          %v765 = vld [vmem:[#allocation4 + $0x48] sm:$0xff]
          %v766 = vld [vmem:[#allocation4 + $0x50] sm:$0xff]
          %v767 = vld [vmem:[#allocation4 + $0x58] sm:$0xff]
          %v768 = vld [vmem:[#allocation4 + $0x60] sm:$0xff]
          %v769 = vld [vmem:[#allocation4 + $0x68] sm:$0xff]
          %v770 = vld [vmem:[#allocation4 + $0x70] sm:$0xff]
          %v771 = vld [vmem:[#allocation4 + $0x78] sm:$0xff]
          %v772 = vadd.f32 %v756, %v660
          %v773 = vadd.f32 %v757, %v661
          %v774 = vadd.f32 %v758, %v662
          %v775 = vadd.f32 %v759, %v663
          %v776 = vadd.f32 %v760, %v664
          %v777 = vadd.f32 %v761, %v665
          %v778 = vadd.f32 %v762, %v666
          %v779 = vadd.f32 %v763, %v667
          %v780 = vadd.f32 %v764, %v668
          %v781 = vadd.f32 %v765, %v669
          %v782 = vadd.f32 %v766, %v670
          %v783 = vadd.f32 %v767, %v671
          %v784 = vadd.f32 %v768, %v672
          %v785 = vadd.f32 %v769, %v673
          %v786 = vadd.f32 %v770, %v674
          %v787 = vadd.f32 %v771, %v675
          %788 = vst [vmem:[#allocation8] sm:$0xff] %v772
          %789 = vst [vmem:[#allocation8 + $0x8] sm:$0xff] %v773
          %790 = vst [vmem:[#allocation8 + $0x10] sm:$0xff] %v774
          %791 = vst [vmem:[#allocation8 + $0x18] sm:$0xff] %v775
          %792 = vst [vmem:[#allocation8 + $0x20] sm:$0xff] %v776
          %793 = vst [vmem:[#allocation8 + $0x28] sm:$0xff] %v777
          %794 = vst [vmem:[#allocation8 + $0x30] sm:$0xff] %v778
          %795 = vst [vmem:[#allocation8 + $0x38] sm:$0xff] %v779
          %796 = vst [vmem:[#allocation8 + $0x40] sm:$0xff] %v780
          %797 = vst [vmem:[#allocation8 + $0x48] sm:$0xff] %v781
          %798 = vst [vmem:[#allocation8 + $0x50] sm:$0xff] %v782
          %799 = vst [vmem:[#allocation8 + $0x58] sm:$0xff] %v783
          %800 = vst [vmem:[#allocation8 + $0x60] sm:$0xff] %v784
          %801 = vst [vmem:[#allocation8 + $0x68] sm:$0xff] %v785
          %802 = vst [vmem:[#allocation8 + $0x70] sm:$0xff] %v786
          %803 = vst [vmem:[#allocation8 + $0x78] sm:$0xff] %v787
        $region85: #{tpu_custom_call.1} parent=68 // pred_fallthru
          _
        // Predicated region
        $region86: #{tpu_custom_call.1} parent=68 // pred_check
          %p804 = pneg %p129
        $region87: #{tpu_custom_call.1} parent=68 // pred_check_branch
          %806 = sbr.rel (%p804) target = $region89
        $region88: #{tpu_custom_call.1} parent=68 // pred_region
          %s807 = smul.u32 16, %s23
          %s809 = ssub.s32 1024, 1024
          %810 = vsyncadd [#allocation6], %s809
          %s811 = smul.addr %s807, 64
          %s812 = scalar_lea.hbm %s3, %s811
          %s813 = sshll.u32 [#allocation7], 4
          %s814 = int_to_ptr.vmem [resolvable:$true] %s813
          %819 = dma.vmem_to_hbm [thread:$0]  %s814, 1024, %s812, [#allocation6], 64, 64, 4
        $region89: #{tpu_custom_call.1} parent=68 // pred_fallthru
          _
        // Predicated region
        $region90: #{tpu_custom_call.1} parent=68 // pred_check
          %p820 = pneg %p155
        $region91: #{tpu_custom_call.1} parent=68 // pred_check_branch
          %822 = sbr.rel (%p820) target = $region93
        $region92: #{tpu_custom_call.1} parent=68 // pred_region
          %s823 = smul.u32 16, %s23
          %s825 = ssub.s32 2048, 2048
          %826 = vsyncadd [#allocation9], %s825
          %s827 = smul.addr %s823, 128
          %s828 = scalar_lea.hbm %s4, %s827
          %s829 = sshll.u32 [#allocation8], 4
          %s830 = int_to_ptr.vmem [resolvable:$true] %s829
          %835 = dma.vmem_to_hbm [thread:$0]  %s830, 2048, %s828, [#allocation9], 128, 128, 8
        $region93: #{tpu_custom_call.1} parent=68 // pred_fallthru
          _
        // Predicated region
        $region94: #{tpu_custom_call.1} parent=68 // pred_check
          %p836 = pneg %p129
        $region95: #{tpu_custom_call.1} parent=68 // pred_check_branch
          %838 = sbr.rel (%p836) target = $region97
        $region96: #{tpu_custom_call.1} parent=68 // pred_region
          %839 = dma.done [#allocation6], 1024
        $region97: #{tpu_custom_call.1} parent=68 // pred_fallthru
          _
        // Predicated region
        $region98: #{tpu_custom_call.1} parent=68 // pred_check
          %p840 = pneg %p155
        $region99: #{tpu_custom_call.1} parent=68 // pred_check_branch
          %842 = sbr.rel (%p840) target = $region101
        $region100: #{tpu_custom_call.1} parent=68 // pred_region
          %843 = dma.done [#allocation9], 2048
        $region101: #{tpu_custom_call.1} parent=68 // pred_fallthru
          _
      $region69: #{tpu_custom_call.1} parent=5 // pred_fallthru
        _
      %p844 = scmp.le.s32.totalorder 2, %s14
      // Predicated region
      $region102: #{tpu_custom_call.1} parent=5 // pred_check
        %p845 = pneg %p844
      $region103: #{tpu_custom_call.1} parent=5 // pred_check_branch
        %847 = sbr.rel (%p845) target = $region105
      $region104: #{tpu_custom_call.1} parent=5 // pred_region
        %s848 = ssub.s32 %s14, 2
      $region105: #{tpu_custom_call.1} parent=5 // pred_fallthru
        _
    $region6: #{tpu_custom_call.1} parent=1 // loop_footer
      %s18 = sadd.s32 1, %s14
    $region7: #{tpu_custom_call.1} parent=1 // loop_footer_branch
      %13 = sbr.rel target = $region3
    $region8: #{tpu_custom_call.1} parent=1 // loop_exit
      _
    %849 = vsyncpa [#allocation5], 1
    %s850 = scalar_lea.sflag [#allocation5], 1
    %851 = vsyncpa %s850, 1
    %852 = vsyncpa [#allocation6], 1
    %s853 = scalar_lea.sflag [#allocation6], 1
    %854 = vsyncpa %s853, 1
    %855 = vsyncpa [#allocation9], 1

</llo_original>
